<compile_context>
chip_gen: v5e
topology: v5e:2x2
jax: 0.10.0
libtpu: 0.0.40
codegen_flags: <defaults>
</compile_context>

<pallas_src>
import functools

import jax
import jax.numpy as jnp
from jax.experimental import pallas as pl
from jax.experimental.pallas import tpu as pltpu


def _round_up(v: int, m: int) -> int:
    return (v + m - 1) // m * m


# ---------------------------------------------------------------------------
# Stage 1: h = conv1(relu(bn1(x)))  +  per-block partial sums of h, h^2 for BN2.
# ---------------------------------------------------------------------------
def _stage1_kernel(x_ref, sb_ref, w_ref, h_ref, stats_ref, *, valid_len):
    # x_ref    : (B, Cp, Lp)    f32   input batch block
    # sb_ref   : (2, Cp, 1)     f32   [folded BN1 scale ; folded BN1 bias]
    # w_ref    : (Mp, Cp)       bf16  1x1-conv weight (out-chan, in-chan)
    # h_ref    : (B, Mp, Lp)    bf16  bottleneck activations (output)
    # stats_ref: (1, 2, Mp, 1)  f32   per-block [sum(h) ; sum(h^2)] (output)
    B, Cp, Lp = x_ref.shape
    Mp = h_ref.shape[1]
    scale = sb_ref[0]                                    # (Cp, 1)
    bias = sb_ref[1]                                     # (Cp, 1)
    w = w_ref[...]                                       # (Mp, Cp) bf16

    if valid_len < Lp:                                   # compile-time branch
        # Zero the padded L tail of y so h's pad columns are exactly zero, which
        # makes them contribute nothing to the BN2 partial sums.
        pad_col = jax.lax.broadcasted_iota(jnp.int32, (Cp, Lp), 1) >= valid_len

    s1 = jnp.zeros((Mp, 1), jnp.float32)
    s2 = jnp.zeros((Mp, 1), jnp.float32)
    for b in range(B):                                   # static, unrolled
        y = jnp.maximum(x_ref[b] * scale + bias, 0.0)    # BN1 + ReLU   (Cp, Lp)
        if valid_len < Lp:
            y = jnp.where(pad_col, 0.0, y)
        h = jnp.dot(w, y.astype(w.dtype),                # MXU bf16xbf16 -> f32
                    preferred_element_type=jnp.float32)  # (Mp, Lp)
        s1 = s1 + jnp.sum(h, axis=1, keepdims=True)      # XLU lane reduce
        s2 = s2 + jnp.sum(h * h, axis=1, keepdims=True)
        h_ref[b] = h.astype(h_ref.dtype)                 # bf16 store (halves HBM)
    stats_ref[0, 0, :, :] = s1
    stats_ref[0, 1, :, :] = s2


# ---------------------------------------------------------------------------
# Stage 2: out = concat([x, conv2(relu(bn2(h)))], channel axis)
# ---------------------------------------------------------------------------
def _stage2_kernel(x_ref, h_ref, sb_ref, w_ref, out_ref, *, valid_len):
    # x_ref  : (B, Cp, Lp)     f32   original input (passthrough for the concat)
    # h_ref  : (B, Mp, Lp)     bf16  stage-1 activations
    # sb_ref : (2, Mp, 1)      f32   [folded BN2 scale ; folded BN2 bias]
    # w_ref  : (3*Gp, Mp)      bf16  conv2 weight, 3 taps fused along out-chan axis
    # out_ref: (B, Cp+Gp, Lp)  f32   [x ; conv]
    B, Cp, Lp = x_ref.shape
    Mp = h_ref.shape[1]
    Gp = out_ref.shape[1] - Cp

    scale = sb_ref[0]                                    # (Mp, 1)
    bias = sb_ref[1]
    w = w_ref[...]                                       # (3*Gp, Mp) bf16

    # Loop-invariant masks, hoisted out of the batch loop.
    col = jax.lax.broadcasted_iota(jnp.int32, (Gp, Lp), 1)
    first_col = col == 0
    last_col = col == Lp - 1
    if valid_len < Lp:
        pad_col = jax.lax.broadcasted_iota(jnp.int32, (Mp, Lp), 1) >= valid_len

    for b in range(B):                                   # static, unrolled
        y = jnp.maximum(h_ref[b] * scale + bias, 0.0)    # BN2 + ReLU   (Mp, Lp) f32
        if valid_len < Lp:
            # Zero the padded L tail so it cannot leak into the last valid column
            # through the k=3 'same' stencil.
            y = jnp.where(pad_col, 0.0, y)

        # One fused MXU pass for all 3 taps: (3*Gp, Mp) @ (Mp, Lp) -> (3*Gp, Lp).
        p = jnp.dot(w, y.astype(w.dtype), preferred_element_type=jnp.float32)
        p0 = p[0:Gp]             # tap 0 (left neighbour), sublane-aligned slice
        p1 = p[Gp:2 * Gp]        # tap 1 (center)
        p2 = p[2 * Gp:3 * Gp]    # tap 2 (right neighbour)

        # 'same' padding via lane rotation (XLU) + boundary masks instead of a padded
        # buffer + lane-misaligned slices.  out[l] = p0[l-1] + p1[l] + p2[l+1].
        left = jnp.where(first_col, 0.0, pltpu.roll(p0, 1, 1))
        right = jnp.where(last_col, 0.0, pltpu.roll(p2, Lp - 1, 1))
        conv = left + p1 + right                         # (Gp, Lp)

        # Sublane/lane-dense concat stores (Cp, Gp multiples of 8; Lp multiple of 128).
        out_ref[b, :Cp, :] = x_ref[b]
        out_ref[b, Cp:, :] = conv.astype(out_ref.dtype)


# ---------------------------------------------------------------------------
# Wrapper
# ---------------------------------------------------------------------------
def bottleneck_layer(x, gamma1, beta1, w1, gamma2, beta2, w2, *,
                     eps=1e-5, batch_block=4):
    """BottleneckLayer forward (training-mode BatchNorm statistics).

    x : (N, C, L) f32
    w1: (4*G, C, 1) f32  (PyTorch Conv1d k=1 weight)
    w2: (G, 4*G, 3) f32  (PyTorch Conv1d k=3 weight)
    returns (N, C + G, L) f32
    """
    x = x.astype(jnp.float32)
    N, C, L = x.shape
    M = w1.shape[0]            # 4 * growth_rate
    G = w2.shape[0]

    # ---- aligned / blocked geometry ----
    Cp = _round_up(C, 8)
    Mp = _round_up(M, 16)      # h is stored bf16 -> 16-row sublane packing
    Gp = _round_up(G, 8)
    Lp = _round_up(L, 128)
    # Largest divisor of N that is <= batch_block: never any batch padding.
    B_blk = max(d for d in range(1, min(batch_block, N) + 1) if N % d == 0)
    NB = N // B_blk
    grid = (NB,)

    cparams = pltpu.CompilerParams(
        dimension_semantics=("parallel",),     # batch axis; feeds both v7x TCs
        vmem_limit_bytes=32 * 1024 * 1024,
    )

    # ---- BN1 batch stats folded to scale/bias (single fused pass over x) ----
    cnt = float(N * L)
    sx = jnp.sum(x, axis=(0, 2))
    sxx = jnp.sum(x * x, axis=(0, 2))
    mean1 = sx / cnt
    var1 = jnp.maximum(sxx / cnt - mean1 * mean1, 0.0)
    scale1 = gamma1 / jnp.sqrt(var1 + eps)
    bias1 = beta1 - mean1 * scale1

    x_pad = jnp.pad(x, ((0, 0), (0, Cp - C), (0, Lp - L)))
    sb1 = jnp.stack([jnp.pad(scale1, (0, Cp - C)),
                     jnp.pad(bias1, (0, Cp - C))]).reshape(2, Cp, 1).astype(jnp.float32)
    w1_mat = jnp.pad(w1[:, :, 0], ((0, Mp - M), (0, Cp - C))).astype(jnp.bfloat16)

    h_pad, stats = pl.pallas_call(
        functools.partial(_stage1_kernel, valid_len=L),
        out_shape=(jax.ShapeDtypeStruct((N, Mp, Lp), jnp.bfloat16),
                   jax.ShapeDtypeStruct((NB, 2, Mp, 1), jnp.float32)),
        grid_spec=pltpu.PrefetchScalarGridSpec(
            num_scalar_prefetch=0,
            grid=grid,
            in_specs=[
                pl.BlockSpec((B_blk, Cp, Lp), lambda n: (n, 0, 0)),
                pl.BlockSpec((2, Cp, 1), lambda n: (0, 0, 0)),
                pl.BlockSpec((Mp, Cp), lambda n: (0, 0)),
            ],
            out_specs=[
                pl.BlockSpec((B_blk, Mp, Lp), lambda n: (n, 0, 0)),
                pl.BlockSpec((1, 2, Mp, 1), lambda n: (n, 0, 0, 0)),
            ],
        ),
        compiler_params=cparams,
    )(x_pad, sb1, w1_mat)

    # ---- BN2 stats from the fused in-kernel partial sums (no HBM pass over h) ----
    s = jnp.sum(stats, axis=0)[..., 0]                   # (2, Mp)
    mean2 = s[0, :M] / cnt
    var2 = jnp.maximum(s[1, :M] / cnt - mean2 * mean2, 0.0)
    scale2 = gamma2 / jnp.sqrt(var2 + eps)
    bias2 = beta2 - mean2 * scale2
    sb2 = jnp.stack([jnp.pad(scale2, (0, Mp - M)),
                     jnp.pad(bias2, (0, Mp - M))]).reshape(2, Mp, 1).astype(jnp.float32)

    # conv2 weight with its 3 taps fused along the out-channel axis -> (3*Gp, Mp)
    w2f = jnp.concatenate(
        [jnp.pad(w2[:, :, t], ((0, Gp - G), (0, Mp - M))) for t in range(3)],
        axis=0).astype(jnp.bfloat16)

    out_pad = pl.pallas_call(
        functools.partial(_stage2_kernel, valid_len=L),
        out_shape=jax.ShapeDtypeStruct((N, Cp + Gp, Lp), jnp.float32),
        grid_spec=pltpu.PrefetchScalarGridSpec(
            num_scalar_prefetch=0,
            grid=grid,
            in_specs=[
                pl.BlockSpec((B_blk, Cp, Lp), lambda n: (n, 0, 0)),
                pl.BlockSpec((B_blk, Mp, Lp), lambda n: (n, 0, 0)),
                pl.BlockSpec((2, Mp, 1), lambda n: (0, 0, 0)),
                pl.BlockSpec((3 * Gp, Mp), lambda n: (0, 0)),
            ],
            out_specs=pl.BlockSpec((B_blk, Cp + Gp, Lp), lambda n: (n, 0, 0)),
        ),
        compiler_params=cparams,
    )(x_pad, h_pad, sb2, w2f)

    if (Cp, Gp, Lp) == (C, G, L):
        return out_pad
    # Strip channel/length padding (glue for odd shapes only).
    return jnp.concatenate(
        [out_pad[:, :C, :L], out_pad[:, Cp:Cp + G, :L]], axis=1)


# ---------------------------------------------------------------------------
# Pure-JAX f32 reference (training-mode BN), mirroring the PyTorch forward.
# ---------------------------------------------------------------------------
def bottleneck_ref(x, gamma1, beta1, w1, gamma2, beta2, w2, eps=1e-5):
    def bn_relu(v, gamma, beta):
        mean = jnp.mean(v, axis=(0, 2), keepdims=True)
        var = jnp.mean((v - mean) ** 2, axis=(0, 2), keepdims=True)
        out = (v - mean) / jnp.sqrt(var + eps) * gamma[None, :, None] + beta[None, :, None]
        return jnp.maximum(out, 0.0)

    y1 = bn_relu(x, gamma1, beta1)
    h = jnp.einsum("mc,ncl->nml", w1[:, :, 0], y1)
    y2 = bn_relu(h, gamma2, beta2)
    L = x.shape[2]
    ypad = jnp.pad(y2, ((0, 0), (0, 0), (1, 1)))
    conv = (jnp.einsum("gm,nml->ngl", w2[:, :, 0], ypad[:, :, 0:L])
            + jnp.einsum("gm,nml->ngl", w2[:, :, 1], ypad[:, :, 1:L + 1])
            + jnp.einsum("gm,nml->ngl", w2[:, :, 2], ypad[:, :, 2:L + 2]))
    return jnp.concatenate([x, conv], axis=1)


def _run_case(key, N, C, G, L):
    M = 4 * G
    k_x, k_w1, k_w2, k_g1, k_b1, k_g2, k_b2 = jax.random.split(key, 7)
    x = jax.random.normal(k_x, (N, C, L), dtype=jnp.float32)
    w1 = 0.1 * jax.random.normal(k_w1, (M, C, 1), dtype=jnp.float32)
    w2 = 0.1 * jax.random.normal(k_w2, (G, M, 3), dtype=jnp.float32)
    gamma1 = 1.0 + 0.05 * jax.random.normal(k_g1, (C,), dtype=jnp.float32)
    beta1 = 0.05 * jax.random.normal(k_b1, (C,), dtype=jnp.float32)
    gamma2 = 1.0 + 0.05 * jax.random.normal(k_g2, (M,), dtype=jnp.float32)
    beta2 = 0.05 * jax.random.normal(k_b2, (M,), dtype=jnp.float32)

    out = bottleneck_layer(x, gamma1, beta1, w1, gamma2, beta2, w2)
    out = jax.block_until_ready(out)
    ref = bottleneck_ref(x, gamma1, beta1, w1, gamma2, beta2, w2)

    assert out.shape == (N, C + G, L), out.shape
    # bf16 MXU operands + bf16 intermediate (f32 accumulation) -> loosened tolerance.
    err = float(jnp.max(jnp.abs(out - ref)))
    assert jnp.allclose(out, ref, atol=6e-2, rtol=6e-2), err


if __name__ == "__main__":
    key = jax.random.PRNGKey(0)
    k1, k2 = jax.random.split(key)

    # Aligned shapes: channels multiples of 8, L multiple of 128, 2 parallel grid steps.
    _run_case(k1, N=8, C=8, G=8, L=128)
    # Small unaligned shapes exercise the channel/length padding + masking paths.
    _run_case(k2, N=2, C=4, G=4, L=16)

    print("KERNEL_OK")
</pallas_src>

<mosaic_0001>
module attributes {stable_mosaic.version = 11 : i64} {
  func.func @_stage1_kernel(%arg0: i32, %arg1: memref<4x8x128xf32, #tpu.memory_space<vmem>>, %arg2: memref<2x8x1xf32, #tpu.memory_space<vmem>>, %arg3: memref<32x8xbf16, #tpu.memory_space<vmem>>, %arg4: memref<4x32x128xbf16, #tpu.memory_space<vmem>>, %arg5: memref<1x2x32x1xf32, #tpu.memory_space<vmem>>) attributes {dimension_semantics = [#tpu.dimension_semantics<parallel>], iteration_bounds = array<i64: 2>, scalar_prefetch = 0 : i64, scratch_operands = 0 : i64, tpu.core_type = #tpu.core_type<tc>, window_params = [{transform_indices = @transform_0, window_bounds = array<i64: 4, 8, 128>}, {pipeline_mode = #tpu.pipeline_mode<synchronous>, transform_indices = @transform_1, window_bounds = array<i64: 2, 8, 1>}, {pipeline_mode = #tpu.pipeline_mode<synchronous>, transform_indices = @transform_2, window_bounds = array<i64: 32, 8>}, {transform_indices = @transform_3, window_bounds = array<i64: 4, 32, 128>}, {transform_indices = @transform_4, window_bounds = array<i64: 1, 2, 32, 1>}]} {
    %c0 = arith.constant 0 : index
    %c0_0 = arith.constant 0 : index
    %c0_1 = arith.constant 0 : index
    %0 = vector.load %arg2[%c0, %c0_0, %c0_1] : memref<2x8x1xf32, #tpu.memory_space<vmem>>, vector<1x8x1xf32>
    %1 = vector.shape_cast %0 : vector<1x8x1xf32> to vector<8x1xf32>
    %c1 = arith.constant 1 : index
    %c0_2 = arith.constant 0 : index
    %c0_3 = arith.constant 0 : index
    %2 = vector.load %arg2[%c1, %c0_2, %c0_3] : memref<2x8x1xf32, #tpu.memory_space<vmem>>, vector<1x8x1xf32>
    %3 = vector.shape_cast %2 : vector<1x8x1xf32> to vector<8x1xf32>
    %c0_4 = arith.constant 0 : index
    %c0_5 = arith.constant 0 : index
    %4 = vector.load %arg3[%c0_4, %c0_5] : memref<32x8xbf16, #tpu.memory_space<vmem>>, vector<32x8xbf16>
    %cst = arith.constant 0.000000e+00 : f32
    %5 = vector.broadcast %cst : f32 to vector<32x1xf32>
    %cst_6 = arith.constant 0.000000e+00 : f32
    %6 = vector.broadcast %cst_6 : f32 to vector<32x1xf32>
    %c0_7 = arith.constant 0 : index
    %c0_8 = arith.constant 0 : index
    %c0_9 = arith.constant 0 : index
    %7 = vector.load %arg1[%c0_7, %c0_8, %c0_9] : memref<4x8x128xf32, #tpu.memory_space<vmem>>, vector<1x8x128xf32>
    %8 = vector.shape_cast %7 : vector<1x8x128xf32> to vector<8x128xf32>
    %9 = vector.broadcast %1 : vector<8x1xf32> to vector<8x128xf32>
    %10 = arith.mulf %8, %9 : vector<8x128xf32>
    %11 = vector.broadcast %3 : vector<8x1xf32> to vector<8x128xf32>
    %12 = arith.addf %10, %11 : vector<8x128xf32>
    %cst_10 = arith.constant 0.000000e+00 : f32
    %13 = vector.broadcast %cst_10 : f32 to vector<8x128xf32>
    %14 = arith.maximumf %12, %13 : vector<8x128xf32>
    %15 = arith.truncf %14 : vector<8x128xf32> to vector<8x128xbf16>
    %cst_11 = arith.constant dense<0.000000e+00> : vector<32x128xf32>
    %16 = tpu.matmul %4, %15, %cst_11 {dimension_numbers = #tpu.dot_dimension_numbers<[1], [0], [0], [1], [0, 0, 1, 1], [], []>} : vector<32x8xbf16>, vector<8x128xbf16>, vector<32x128xf32> -> vector<32x128xf32>
    %cst_12 = arith.constant dense<0.000000e+00> : vector<32xf32>
    %17 = vector.multi_reduction <add>, %16, %cst_12 [1] : vector<32x128xf32> to vector<32xf32>
    %18 = vector.shape_cast %17 : vector<32xf32> to vector<32x1xf32>
    %19 = arith.addf %5, %18 : vector<32x1xf32>
    %20 = arith.mulf %16, %16 : vector<32x128xf32>
    %cst_13 = arith.constant dense<0.000000e+00> : vector<32xf32>
    %21 = vector.multi_reduction <add>, %20, %cst_13 [1] : vector<32x128xf32> to vector<32xf32>
    %22 = vector.shape_cast %21 : vector<32xf32> to vector<32x1xf32>
    %23 = arith.addf %6, %22 : vector<32x1xf32>
    %24 = arith.truncf %16 : vector<32x128xf32> to vector<32x128xbf16>
    %c0_14 = arith.constant 0 : index
    %c0_15 = arith.constant 0 : index
    %c0_16 = arith.constant 0 : index
    %25 = vector.load %arg4[%c0_14, %c0_15, %c0_16] : memref<4x32x128xbf16, #tpu.memory_space<vmem>>, vector<1x32x128xbf16>
    %26 = vector.shape_cast %25 : vector<1x32x128xbf16> to vector<32x128xbf16>
    %27 = vector.shape_cast %24 : vector<32x128xbf16> to vector<1x32x128xbf16>
    tpu.vector_store %arg4[%c0_14, %c0_15, %c0_16], %27 {strides = array<i32>} : memref<4x32x128xbf16, #tpu.memory_space<vmem>>, vector<1x32x128xbf16>,
    %c1_17 = arith.constant 1 : index
    %c0_18 = arith.constant 0 : index
    %c0_19 = arith.constant 0 : index
    %28 = vector.load %arg1[%c1_17, %c0_18, %c0_19] : memref<4x8x128xf32, #tpu.memory_space<vmem>>, vector<1x8x128xf32>
    %29 = vector.shape_cast %28 : vector<1x8x128xf32> to vector<8x128xf32>
    %30 = vector.broadcast %1 : vector<8x1xf32> to vector<8x128xf32>
    %31 = arith.mulf %29, %30 : vector<8x128xf32>
    %32 = vector.broadcast %3 : vector<8x1xf32> to vector<8x128xf32>
    %33 = arith.addf %31, %32 : vector<8x128xf32>
    %cst_20 = arith.constant 0.000000e+00 : f32
    %34 = vector.broadcast %cst_20 : f32 to vector<8x128xf32>
    %35 = arith.maximumf %33, %34 : vector<8x128xf32>
    %36 = arith.truncf %35 : vector<8x128xf32> to vector<8x128xbf16>
    %cst_21 = arith.constant dense<0.000000e+00> : vector<32x128xf32>
    %37 = tpu.matmul %4, %36, %cst_21 {dimension_numbers = #tpu.dot_dimension_numbers<[1], [0], [0], [1], [0, 0, 1, 1], [], []>} : vector<32x8xbf16>, vector<8x128xbf16>, vector<32x128xf32> -> vector<32x128xf32>
    %cst_22 = arith.constant dense<0.000000e+00> : vector<32xf32>
    %38 = vector.multi_reduction <add>, %37, %cst_22 [1] : vector<32x128xf32> to vector<32xf32>
    %39 = vector.shape_cast %38 : vector<32xf32> to vector<32x1xf32>
    %40 = arith.addf %19, %39 : vector<32x1xf32>
    %41 = arith.mulf %37, %37 : vector<32x128xf32>
    %cst_23 = arith.constant dense<0.000000e+00> : vector<32xf32>
    %42 = vector.multi_reduction <add>, %41, %cst_23 [1] : vector<32x128xf32> to vector<32xf32>
    %43 = vector.shape_cast %42 : vector<32xf32> to vector<32x1xf32>
    %44 = arith.addf %23, %43 : vector<32x1xf32>
    %45 = arith.truncf %37 : vector<32x128xf32> to vector<32x128xbf16>
    %c1_24 = arith.constant 1 : index
    %c0_25 = arith.constant 0 : index
    %c0_26 = arith.constant 0 : index
    %46 = vector.load %arg4[%c1_24, %c0_25, %c0_26] : memref<4x32x128xbf16, #tpu.memory_space<vmem>>, vector<1x32x128xbf16>
    %47 = vector.shape_cast %46 : vector<1x32x128xbf16> to vector<32x128xbf16>
    %48 = vector.shape_cast %45 : vector<32x128xbf16> to vector<1x32x128xbf16>
    tpu.vector_store %arg4[%c1_24, %c0_25, %c0_26], %48 {strides = array<i32>} : memref<4x32x128xbf16, #tpu.memory_space<vmem>>, vector<1x32x128xbf16>,
    %c2 = arith.constant 2 : index
    %c0_27 = arith.constant 0 : index
    %c0_28 = arith.constant 0 : index
    %49 = vector.load %arg1[%c2, %c0_27, %c0_28] : memref<4x8x128xf32, #tpu.memory_space<vmem>>, vector<1x8x128xf32>
    %50 = vector.shape_cast %49 : vector<1x8x128xf32> to vector<8x128xf32>
    %51 = vector.broadcast %1 : vector<8x1xf32> to vector<8x128xf32>
    %52 = arith.mulf %50, %51 : vector<8x128xf32>
    %53 = vector.broadcast %3 : vector<8x1xf32> to vector<8x128xf32>
    %54 = arith.addf %52, %53 : vector<8x128xf32>
    %cst_29 = arith.constant 0.000000e+00 : f32
    %55 = vector.broadcast %cst_29 : f32 to vector<8x128xf32>
    %56 = arith.maximumf %54, %55 : vector<8x128xf32>
    %57 = arith.truncf %56 : vector<8x128xf32> to vector<8x128xbf16>
    %cst_30 = arith.constant dense<0.000000e+00> : vector<32x128xf32>
    %58 = tpu.matmul %4, %57, %cst_30 {dimension_numbers = #tpu.dot_dimension_numbers<[1], [0], [0], [1], [0, 0, 1, 1], [], []>} : vector<32x8xbf16>, vector<8x128xbf16>, vector<32x128xf32> -> vector<32x128xf32>
    %cst_31 = arith.constant dense<0.000000e+00> : vector<32xf32>
    %59 = vector.multi_reduction <add>, %58, %cst_31 [1] : vector<32x128xf32> to vector<32xf32>
    %60 = vector.shape_cast %59 : vector<32xf32> to vector<32x1xf32>
    %61 = arith.addf %40, %60 : vector<32x1xf32>
    %62 = arith.mulf %58, %58 : vector<32x128xf32>
    %cst_32 = arith.constant dense<0.000000e+00> : vector<32xf32>
    %63 = vector.multi_reduction <add>, %62, %cst_32 [1] : vector<32x128xf32> to vector<32xf32>
    %64 = vector.shape_cast %63 : vector<32xf32> to vector<32x1xf32>
    %65 = arith.addf %44, %64 : vector<32x1xf32>
    %66 = arith.truncf %58 : vector<32x128xf32> to vector<32x128xbf16>
    %c2_33 = arith.constant 2 : index
    %c0_34 = arith.constant 0 : index
    %c0_35 = arith.constant 0 : index
    %67 = vector.load %arg4[%c2_33, %c0_34, %c0_35] : memref<4x32x128xbf16, #tpu.memory_space<vmem>>, vector<1x32x128xbf16>
    %68 = vector.shape_cast %67 : vector<1x32x128xbf16> to vector<32x128xbf16>
    %69 = vector.shape_cast %66 : vector<32x128xbf16> to vector<1x32x128xbf16>
    tpu.vector_store %arg4[%c2_33, %c0_34, %c0_35], %69 {strides = array<i32>} : memref<4x32x128xbf16, #tpu.memory_space<vmem>>, vector<1x32x128xbf16>,
    %c3 = arith.constant 3 : index
    %c0_36 = arith.constant 0 : index
    %c0_37 = arith.constant 0 : index
    %70 = vector.load %arg1[%c3, %c0_36, %c0_37] : memref<4x8x128xf32, #tpu.memory_space<vmem>>, vector<1x8x128xf32>
    %71 = vector.shape_cast %70 : vector<1x8x128xf32> to vector<8x128xf32>
    %72 = vector.broadcast %1 : vector<8x1xf32> to vector<8x128xf32>
    %73 = arith.mulf %71, %72 : vector<8x128xf32>
    %74 = vector.broadcast %3 : vector<8x1xf32> to vector<8x128xf32>
    %75 = arith.addf %73, %74 : vector<8x128xf32>
    %cst_38 = arith.constant 0.000000e+00 : f32
    %76 = vector.broadcast %cst_38 : f32 to vector<8x128xf32>
    %77 = arith.maximumf %75, %76 : vector<8x128xf32>
    %78 = arith.truncf %77 : vector<8x128xf32> to vector<8x128xbf16>
    %cst_39 = arith.constant dense<0.000000e+00> : vector<32x128xf32>
    %79 = tpu.matmul %4, %78, %cst_39 {dimension_numbers = #tpu.dot_dimension_numbers<[1], [0], [0], [1], [0, 0, 1, 1], [], []>} : vector<32x8xbf16>, vector<8x128xbf16>, vector<32x128xf32> -> vector<32x128xf32>
    %cst_40 = arith.constant dense<0.000000e+00> : vector<32xf32>
    %80 = vector.multi_reduction <add>, %79, %cst_40 [1] : vector<32x128xf32> to vector<32xf32>
    %81 = vector.shape_cast %80 : vector<32xf32> to vector<32x1xf32>
    %82 = arith.addf %61, %81 : vector<32x1xf32>
    %83 = arith.mulf %79, %79 : vector<32x128xf32>
    %cst_41 = arith.constant dense<0.000000e+00> : vector<32xf32>
    %84 = vector.multi_reduction <add>, %83, %cst_41 [1] : vector<32x128xf32> to vector<32xf32>
    %85 = vector.shape_cast %84 : vector<32xf32> to vector<32x1xf32>
    %86 = arith.addf %65, %85 : vector<32x1xf32>
    %87 = arith.truncf %79 : vector<32x128xf32> to vector<32x128xbf16>
    %c3_42 = arith.constant 3 : index
    %c0_43 = arith.constant 0 : index
    %c0_44 = arith.constant 0 : index
    %88 = vector.load %arg4[%c3_42, %c0_43, %c0_44] : memref<4x32x128xbf16, #tpu.memory_space<vmem>>, vector<1x32x128xbf16>
    %89 = vector.shape_cast %88 : vector<1x32x128xbf16> to vector<32x128xbf16>
    %90 = vector.shape_cast %87 : vector<32x128xbf16> to vector<1x32x128xbf16>
    tpu.vector_store %arg4[%c3_42, %c0_43, %c0_44], %90 {strides = array<i32>} : memref<4x32x128xbf16, #tpu.memory_space<vmem>>, vector<1x32x128xbf16>,
    %c0_45 = arith.constant 0 : index
    %c0_46 = arith.constant 0 : index
    %c0_47 = arith.constant 0 : index
    %c0_48 = arith.constant 0 : index
    %91 = vector.load %arg5[%c0_45, %c0_46, %c0_47, %c0_48] : memref<1x2x32x1xf32, #tpu.memory_space<vmem>>, vector<1x1x32x1xf32>
    %92 = vector.shape_cast %91 : vector<1x1x32x1xf32> to vector<32x1xf32>
    %93 = vector.shape_cast %82 : vector<32x1xf32> to vector<1x1x32x1xf32>
    tpu.vector_store %arg5[%c0_45, %c0_46, %c0_47, %c0_48], %93 {strides = array<i32>} : memref<1x2x32x1xf32, #tpu.memory_space<vmem>>, vector<1x1x32x1xf32>,
    %c0_49 = arith.constant 0 : index
    %c1_50 = arith.constant 1 : index
    %c0_51 = arith.constant 0 : index
    %c0_52 = arith.constant 0 : index
    %94 = vector.load %arg5[%c0_49, %c1_50, %c0_51, %c0_52] : memref<1x2x32x1xf32, #tpu.memory_space<vmem>>, vector<1x1x32x1xf32>
    %95 = vector.shape_cast %94 : vector<1x1x32x1xf32> to vector<32x1xf32>
    %96 = vector.shape_cast %86 : vector<32x1xf32> to vector<1x1x32x1xf32>
    tpu.vector_store %arg5[%c0_49, %c1_50, %c0_51, %c0_52], %96 {strides = array<i32>} : memref<1x2x32x1xf32, #tpu.memory_space<vmem>>, vector<1x1x32x1xf32>,
    return
  }
  func.func @transform_0(%arg0: i32) -> (i32, i32, i32) {
    %c0_i32 = arith.constant 0 : i32
    %c0_i32_0 = arith.constant 0 : i32
    %c0_i32_1 = arith.constant 0 : i32
    return %arg0, %c0_i32, %c0_i32_0 : i32, i32, i32
  }
  func.func @transform_1(%arg0: i32) -> (i32, i32, i32) {
    %c0_i32 = arith.constant 0 : i32
    %c0_i32_0 = arith.constant 0 : i32
    %c0_i32_1 = arith.constant 0 : i32
    %c0_i32_2 = arith.constant 0 : i32
    return %c0_i32, %c0_i32_0, %c0_i32_1 : i32, i32, i32
  }
  func.func @transform_2(%arg0: i32) -> (i32, i32) {
    %c0_i32 = arith.constant 0 : i32
    %c0_i32_0 = arith.constant 0 : i32
    %c0_i32_1 = arith.constant 0 : i32
    return %c0_i32, %c0_i32_0 : i32, i32
  }
  func.func @transform_3(%arg0: i32) -> (i32, i32, i32) {
    %c0_i32 = arith.constant 0 : i32
    %c0_i32_0 = arith.constant 0 : i32
    %c0_i32_1 = arith.constant 0 : i32
    return %arg0, %c0_i32, %c0_i32_0 : i32, i32, i32
  }
  func.func @transform_4(%arg0: i32) -> (i32, i32, i32, i32) {
    %c0_i32 = arith.constant 0 : i32
    %c0_i32_0 = arith.constant 0 : i32
    %c0_i32_1 = arith.constant 0 : i32
    %c0_i32_2 = arith.constant 0 : i32
    return %arg0, %c0_i32, %c0_i32_0, %c0_i32_1 : i32, i32, i32, i32
  }
}

</mosaic_0001>

<llo_original>
// kernel: tpu_custom_call.1
$region0: #{tpu_custom_call.1}
  #allocation0 [shape = 'u32[]', space=smem, size = 0x4, offset = 0x4, fixed_abs, tag = 'smem constant byte address 0x4 - core index']
  #allocation1 [shape = 'u32[72,128]{1,0:T(1,128)}', space=vmem, size = 0x9000, scoped, tag = 'internal scratch']
  %s0 = inlined_call_operand.hbm [shape: f32[8,8,128], index: 0, kind: input, shape index: {}]
  %s1 = inlined_call_operand.vmem [shape: f32[2,8,1], index: 1, kind: input, shape index: {}]
  %s2 = inlined_call_operand.vmem [shape: bf16[32,8], index: 2, kind: input, shape index: {}]
  %s3 = inlined_call_operand.hbm [shape: bf16[8,32,128], index: 3, kind: output, shape index: {0}]
  %s4 = inlined_call_operand.vmem [shape: f32[2,2,32,1], index: 4, kind: output, shape index: {1}]
  %5 = xla_tuple %s3, %s4
  %s6 = sld [smem:[#allocation0]]
  $region57: #{tpu_custom_call.1} parent=0
    _
  %s8 = ssub.s32 1, %s6
  %s9 = scalar_select 0, %s8, %s6
  $region1: #{tpu_custom_call.1} parent=0
    #allocation2 [shape = 'u8[32768]{0}', space=vmem, size = 0x8000, scoped, tag = 'input window, operand 0']
    #allocation3 [shape = 's32[2]{0}', space=sflag, size = 0x8, scoped, tag = 'scoped memory for tpu_custom_call.1']
    #allocation4 [shape = 's32[2]{0}', space=sflag, size = 0x8, scoped, tag = 'scoped memory for tpu_custom_call.1']
    #allocation5 [shape = 'u8[65536]{0}', space=vmem, size = 0x10000, scoped, tag = 'output window, operand 0']
    %10 = vsyncpa [#allocation3], 0
    %s11 = scalar_lea.sflag [#allocation3], 1
    %12 = vsyncpa %s11, 0
    %13 = vsyncpa [#allocation4], 0
    %s14 = scalar_lea.sflag [#allocation4], 1
    %15 = vsyncpa %s14, 0
    loop: start=0, step=1, limit=4
    $region2: #{tpu_custom_call.1} parent=1 // loop_pre_header
      _
    $region3: #{tpu_custom_call.1} parent=1 // loop_header
      %s17 = sphi 0, %s21
      %p18 = scmp.ge.s32.totalorder %s17, 4
      %s27 = sphi 0, %s29
      %s30 = sphi 0, %s27
      %s31 = sphi 0, %s30
      %s47 = sphi 0, %s31
      %s51 = sphi 0, %s51
      %s53 = sphi 0, %s51
      %s54 = sphi 0, %s53
      %s68 = sphi 0, %s54
      %s72 = sphi 0, %s72
      %s74 = sphi 0, %s72
      %s75 = sphi 0, %s74
      %s89 = sphi 0, %s75
      %s95 = sphi 0, %s97
      %s98 = sphi 0, %s95
      %s99 = sphi 0, %s98
      %s115 = sphi 0, %s99
      %s121 = sphi 0, %s123
      %s124 = sphi 0, %s121
      %s125 = sphi 0, %s124
      %s141 = sphi 0, %s125
    $region4: #{tpu_custom_call.1} parent=1 // loop_header_branch
      %20 = sbr.rel (%p18) target = $region8
    $region5: #{tpu_custom_call.1} parent=1 // loop_body
      %s22 = ssub.s32 %s17, 1
      %s23 = ssub.s32 %s17, 2
      %s24 = sadd.s32 %s17, 1
      %s25 = ssub.s32 %s17, %s24
      %p26 = scmp.eq.s32.totalorder %s25, 0
      %s28 = sadd.s32 %s27, 1
      %s29 = scalar_select %p26, %s27, %s28
      %p32 = pneg %p26
      %p33 = scmp.eq.s32.totalorder %s17, 1
      %p34 = por %p32, %p33
      %p35 = scmp.ne.s32.totalorder %s27, %s30
      %p36 = scmp.eq.s32.totalorder %s17, 0
      %p37 = por %p35, %p36
      %p38 = scmp.ne.s32.totalorder %s27, %s30
      %p39 = scmp.eq.s32.totalorder %s22, 1
      %p40 = por %p38, %p39
      %p41 = scmp.ne.s32.totalorder %s30, %s31
      %p42 = scmp.eq.s32.totalorder %s22, 0
      %p43 = por %p41, %p42
      %p44 = scmp.ne.s32.totalorder %s30, %s31
      %p45 = scmp.eq.s32.totalorder %s23, 1
      %p46 = por %p44, %p45
      %p48 = scmp.ne.s32.totalorder %s31, %s47
      %p49 = scmp.eq.s32.totalorder %s23, 0
      %p50 = por %p48, %p49
      %s52 = sadd.s32 %s51, 1
      %p55 = scmp.eq.s32.totalorder %s17, 1
      %p56 = scmp.ne.s32.totalorder %s51, %s53
      %p57 = scmp.eq.s32.totalorder %s17, 0
      %p58 = por %p56, %p57
      %p59 = scmp.ne.s32.totalorder %s51, %s53
      %p60 = scmp.eq.s32.totalorder %s22, 1
      %p61 = por %p59, %p60
      %p62 = scmp.ne.s32.totalorder %s53, %s54
      %p63 = scmp.eq.s32.totalorder %s22, 0
      %p64 = por %p62, %p63
      %p65 = scmp.ne.s32.totalorder %s53, %s54
      %p66 = scmp.eq.s32.totalorder %s23, 1
      %p67 = por %p65, %p66
      %p69 = scmp.ne.s32.totalorder %s54, %s68
      %p70 = scmp.eq.s32.totalorder %s23, 0
      %p71 = por %p69, %p70
      %s73 = sadd.s32 %s72, 1
      %p76 = scmp.eq.s32.totalorder %s17, 1
      %p77 = scmp.ne.s32.totalorder %s72, %s74
      %p78 = scmp.eq.s32.totalorder %s17, 0
      %p79 = por %p77, %p78
      %p80 = scmp.ne.s32.totalorder %s72, %s74
      %p81 = scmp.eq.s32.totalorder %s22, 1
      %p82 = por %p80, %p81
      %p83 = scmp.ne.s32.totalorder %s74, %s75
      %p84 = scmp.eq.s32.totalorder %s22, 0
      %p85 = por %p83, %p84
      %p86 = scmp.ne.s32.totalorder %s74, %s75
      %p87 = scmp.eq.s32.totalorder %s23, 1
      %p88 = por %p86, %p87
      %p90 = scmp.ne.s32.totalorder %s75, %s89
      %p91 = scmp.eq.s32.totalorder %s23, 0
      %p92 = por %p90, %p91
      %s93 = ssub.s32 %s17, %s24
      %p94 = scmp.eq.s32.totalorder %s93, 0
      %s96 = sadd.s32 %s95, 1
      %s97 = scalar_select %p94, %s95, %s96
      %p100 = pneg %p94
      %p101 = scmp.eq.s32.totalorder %s17, 1
      %p102 = por %p100, %p101
      %p103 = scmp.ne.s32.totalorder %s95, %s98
      %p104 = scmp.eq.s32.totalorder %s17, 0
      %p105 = por %p103, %p104
      %p106 = scmp.ne.s32.totalorder %s95, %s98
      %p107 = scmp.eq.s32.totalorder %s22, 1
      %p108 = por %p106, %p107
      %p109 = scmp.ne.s32.totalorder %s98, %s99
      %p110 = scmp.eq.s32.totalorder %s22, 0
      %p111 = por %p109, %p110
      %p112 = scmp.ne.s32.totalorder %s98, %s99
      %p113 = scmp.eq.s32.totalorder %s23, 1
      %p114 = por %p112, %p113
      %p116 = scmp.ne.s32.totalorder %s99, %s115
      %p117 = scmp.eq.s32.totalorder %s23, 0
      %p118 = por %p116, %p117
      %s119 = ssub.s32 %s17, %s24
      %p120 = scmp.eq.s32.totalorder %s119, 0
      %s122 = sadd.s32 %s121, 1
      %s123 = scalar_select %p120, %s121, %s122
      %p126 = pneg %p120
      %p127 = scmp.eq.s32.totalorder %s17, 1
      %p128 = por %p126, %p127
      %p129 = scmp.ne.s32.totalorder %s121, %s124
      %p130 = scmp.eq.s32.totalorder %s17, 0
      %p131 = por %p129, %p130
      %p132 = scmp.ne.s32.totalorder %s121, %s124
      %p133 = scmp.eq.s32.totalorder %s22, 1
      %p134 = por %p132, %p133
      %p135 = scmp.ne.s32.totalorder %s124, %s125
      %p136 = scmp.eq.s32.totalorder %s22, 0
      %p137 = por %p135, %p136
      %p138 = scmp.ne.s32.totalorder %s124, %s125
      %p139 = scmp.eq.s32.totalorder %s23, 1
      %p140 = por %p138, %p139
      %p142 = scmp.ne.s32.totalorder %s125, %s141
      %p143 = scmp.eq.s32.totalorder %s23, 0
      %p144 = por %p142, %p143
      %p145 = scmp.le.s32.totalorder 1, %s17
      %p146 = scmp.lt.s32.totalorder %s17, 3
      %p147 = pnand %p145, %p146
      %p148 = pneg %p147
      // Predicated region
      $region9: #{tpu_custom_call.1} parent=5 // pred_check
        _
      $region10: #{tpu_custom_call.1} parent=5 // pred_check_branch
        %150 = sbr.rel (%p147) target = $region12
      $region11: #{tpu_custom_call.1} parent=5 // pred_region
        %s151 = ssub.s32 %s17, 1
        // Predicated region
        $region13: #{tpu_custom_call.1} parent=11 // pred_check
          %p152 = pneg %p64
        $region14: #{tpu_custom_call.1} parent=11 // pred_check_branch
          %154 = sbr.rel (%p152) target = $region16
        $region15: #{tpu_custom_call.1} parent=11 // pred_region
          _
        $region16: #{tpu_custom_call.1} parent=11 // pred_fallthru
          _
        // Predicated region
        $region17: #{tpu_custom_call.1} parent=11 // pred_check
          %p155 = pneg %p85
        $region18: #{tpu_custom_call.1} parent=11 // pred_check_branch
          %157 = sbr.rel (%p155) target = $region20
        $region19: #{tpu_custom_call.1} parent=11 // pred_region
          _
        $region20: #{tpu_custom_call.1} parent=11 // pred_fallthru
          _
      $region12: #{tpu_custom_call.1} parent=5 // pred_fallthru
        _
      %p158 = scmp.lt.s32.totalorder %s17, 2
      // Predicated region
      $region21: #{tpu_custom_call.1} parent=5 // pred_check
        %p159 = pneg %p158
      $region22: #{tpu_custom_call.1} parent=5 // pred_check_branch
        %161 = sbr.rel (%p159) target = $region24
      $region23: #{tpu_custom_call.1} parent=5 // pred_region
        // Predicated region
        $region25: #{tpu_custom_call.1} parent=23 // pred_check
          %p162 = pneg %p37
        $region26: #{tpu_custom_call.1} parent=23 // pred_check_branch
          %164 = sbr.rel (%p162) target = $region28
        $region27: #{tpu_custom_call.1} parent=23 // pred_region
          %s165 = sand.u32 %s27, 1
          %s166 = scalar_lea.sflag [#allocation3], %s165
          %s167 = sand.u32 %s27, 1
          %s168 = smul.addr %s167, 32
          %s169 = scalar_lea.vmem [#allocation2], %s168
          %s170 = smul.u32 4, %s17
          %172 = vsyncadd %s166, 0
          %s173 = smul.addr %s170, 8
          %s174 = scalar_lea.hbm %s0, %s173
          %s175 = sshll.u32 %s174, 4
          %s176 = int_to_ptr.hbm [resolvable:$true] %s175
          %s177 = sshll.u32 %s169, 4
          %s178 = int_to_ptr.vmem [resolvable:$true] %s177
          %183 = dma.hbm_to_vmem [thread:$0]  %s176, 512, %s178, %s166, 128, 128, 8
        $region28: #{tpu_custom_call.1} parent=23 // pred_fallthru
          _
      $region24: #{tpu_custom_call.1} parent=5 // pred_fallthru
        _
      %p184 = scmp.le.s32.totalorder 1, %s17
      %p185 = scmp.lt.s32.totalorder %s17, 3
      %p186 = pnand %p184, %p185
      %p187 = pneg %p186
      // Predicated region
      $region29: #{tpu_custom_call.1} parent=5 // pred_check
        _
      $region30: #{tpu_custom_call.1} parent=5 // pred_check_branch
        %189 = sbr.rel (%p186) target = $region32
      $region31: #{tpu_custom_call.1} parent=5 // pred_region
        %s190 = ssub.s32 %s17, 1
        %s191 = sand.u32 %s30, 1
        %s192 = scalar_lea.sflag [#allocation3], %s191
        %s193 = sand.u32 %s30, 1
        %s194 = smul.addr %s193, 32
        %s195 = scalar_lea.vmem [#allocation2], %s194
        // Predicated region
        $region33: #{tpu_custom_call.1} parent=31 // pred_check
          %p196 = pneg %p43
        $region34: #{tpu_custom_call.1} parent=31 // pred_check_branch
          %198 = sbr.rel (%p196) target = $region36
        $region35: #{tpu_custom_call.1} parent=31 // pred_region
          %200 = dma.done %s192, 512
        $region36: #{tpu_custom_call.1} parent=31 // pred_fallthru
          _
        %s201 = sand.u32 %s30, 1
        %s202 = scalar_lea.sflag [#allocation3], %s201
        %s203 = sand.u32 %s30, 1
        %s204 = smul.addr %s203, 32
        %s205 = scalar_lea.vmem [#allocation2], %s204
        %p206 = pneg %p43
        %p207 = pneg %p40
        %p208 = pneg %p64
        %p209 = pneg %p61
        %p210 = pneg %p85
        %p211 = pneg %p82
        %p212 = pneg %p111
        %p213 = pneg %p108
        %s214 = sand.u32 %s98, 1
        %s215 = scalar_lea.sflag [#allocation4], %s214
        %s216 = sand.u32 %s98, 1
        %s217 = smul.addr %s216, 64
        %s218 = scalar_lea.vmem [#allocation5], %s217
        %p219 = pneg %p137
        %p220 = pneg %p134
        %p221 = scmp.lt.s32.totalorder %s22, 1
        %s222 = scalar_select %p221, %s22, 1
        %s223 = smul.addr %s222, 8
        %s224 = smul.addr %s223, 8
        %s225 = scalar_lea.vmem %s4, %s224
        %s226 = smul.u32 4, %s22
        %s227 = smul.u32 4, %s22
        %p228 = scmp.lt.s32.totalorder %s22, 1
        %s229 = scalar_select %p228, %s22, 1
        %s230 = smul.addr %s229, 8
        %s231 = smul.addr %s230, 8
        %s232 = scalar_lea.vmem %s4, %s231
        %v234 = vld [vmem:[%s1] sm:$0xff]
        %s235 = scalar_lea.vmem %s1, 8
        %v236 = vld [vmem:[%s235] sm:$0xff]
        %v237 = vld [vmem:[%s2] sm:$0xf]
        %v238 = vld [vmem:[%s2 + $0x4] sm:$0xf]
        %v239 = vld [vmem:[%s2 + $0x8] sm:$0xf]
        %v240 = vld [vmem:[%s2 + $0xc] sm:$0xf]
        %v241 = vld [vmem:[%s195] sm:$0xff]
        %243 = vset.pattern.permute.xlu0 0
        %244 = vperm.xlu0 %243, %v234
        %v245 = vpop.permute.xlu0 %244
        %v247 = vmul.f32 %v241, %v245
        %249 = vset.pattern.permute.xlu0 0
        %250 = vperm.xlu0 %249, %v236
        %v251 = vpop.permute.xlu0 %250
        %v253 = vadd.f32 %v247, %v251
        %v254 = vmax.f32 %v253, 0.0
        %v255 = vpack.c.bf16 %v254, %v254
        %v260 = vunpack.c.l.b16 %v237
        %v261 = vunpack.c.l.b16 %v238
        %v262 = vunpack.c.l.b16 %v239
        %v263 = vunpack.c.l.b16 %v240
        %v264 = vpack.c.b16 %v261, %v260
        %v265 = vpack.c.b16 %v263, %v262
        %vm266 = vcmask 64512
        %v268 = vsel %vm266, %v264, 0
        %v271 = vsel %vm266, %v265, 0
        %vm273 = vcmask 1043456
        %v275 = vsel %vm273, %v255, 0
        %277 = vmatpush.bf16.msra.mxu0 0
        %278 = vmatpush.bf16.msra.mxu0 0
        %279 = vmatpush.bf16.msra.mxu0 0
        %280 = vmatpush.bf16.msra.mxu0 0
        %281 = vmatpush.bf16.msra.mxu0 0
        %282 = vmatpush.bf16.msra.mxu0 0
        %283 = vmatpush.bf16.msra.mxu0 0
        %284 = vmatpush.bf16.msra.mxu0 %v275
        %285 = vmatmul.bf16.gmra.mxu0 %v268
        %v286 = vpop.f32.mrf.mxu0
        %v287 = vadd.f32 0.0, %v286
        %v288 = vpop.f32.mrf.mxu0
        %v289 = vadd.f32 0.0, %v288
        %290 = vmatmul.bf16.gmra.mxu0 %v271
        %v291 = vpop.f32.mrf.mxu0
        %v292 = vadd.f32 0.0, %v291
        %v293 = vpop.f32.mrf.mxu0
        %v294 = vadd.f32 0.0, %v293
        %295 = vdwg.mxu0
        %296 = vadd.xlane.f32.xlu0 %v287
        %v297 = vpop.xlane.xlu0 %296
        %298 = vadd.xlane.f32.xlu0 %v289
        %v299 = vpop.xlane.xlu0 %298
        %300 = vadd.xlane.f32.xlu0 %v292
        %v301 = vpop.xlane.xlu0 %300
        %302 = vadd.xlane.f32.xlu0 %v294
        %v303 = vpop.xlane.xlu0 %302
        %v304 = vadd.f32 %v297, 0.0
        %v305 = vadd.f32 %v299, 0.0
        %v306 = vadd.f32 %v301, 0.0
        %v307 = vadd.f32 %v303, 0.0
        %v308 = vmul.f32 %v287, %v287
        %v309 = vmul.f32 %v289, %v289
        %v310 = vmul.f32 %v292, %v292
        %v311 = vmul.f32 %v294, %v294
        %312 = vadd.xlane.f32.xlu0 %v308
        %v313 = vpop.xlane.xlu0 %312
        %314 = vadd.xlane.f32.xlu0 %v309
        %v315 = vpop.xlane.xlu0 %314
        %316 = vadd.xlane.f32.xlu0 %v310
        %v317 = vpop.xlane.xlu0 %316
        %318 = vadd.xlane.f32.xlu0 %v311
        %v319 = vpop.xlane.xlu0 %318
        %v320 = vadd.f32 %v313, 0.0
        %v321 = vadd.f32 %v315, 0.0
        %v322 = vadd.f32 %v317, 0.0
        %v323 = vadd.f32 %v319, 0.0
        %v324 = vpack.c.bf16 %v287, %v287
        %v325 = vpack.c.bf16 %v289, %v289
        %v326 = vpack.c.bf16 %v292, %v292
        %v327 = vpack.c.bf16 %v294, %v294
        %328 = vst [vmem:[%s218] sm:$0xf] %v324
        %329 = vst [vmem:[%s218 + $0x4] sm:$0xf] %v325
        %330 = vst [vmem:[%s218 + $0x8] sm:$0xf] %v326
        %331 = vst [vmem:[%s218 + $0xc] sm:$0xf] %v327
        %s332 = scalar_lea.vmem %s195, 8 [#allocation2]
        %v333 = vld [vmem:[%s332] sm:$0xff]
        %v334 = vmul.f32 %v333, %v245
        %v335 = vadd.f32 %v334, %v251
        %v336 = vmax.f32 %v335, 0.0
        %v337 = vpack.c.bf16 %v336, %v336
        %v339 = vsel %vm273, %v337, 0
        %341 = vmatpush.bf16.msra.mxu0 0
        %342 = vmatpush.bf16.msra.mxu0 0
        %343 = vmatpush.bf16.msra.mxu0 0
        %344 = vmatpush.bf16.msra.mxu0 0
        %345 = vmatpush.bf16.msra.mxu0 0
        %346 = vmatpush.bf16.msra.mxu0 0
        %347 = vmatpush.bf16.msra.mxu0 0
        %348 = vmatpush.bf16.msra.mxu0 %v339
        %349 = vmatmul.bf16.gmra.mxu0 %v268
        %v350 = vpop.f32.mrf.mxu0
        %v351 = vadd.f32 0.0, %v350
        %v352 = vpop.f32.mrf.mxu0
        %v353 = vadd.f32 0.0, %v352
        %354 = vmatmul.bf16.gmra.mxu0 %v271
        %v355 = vpop.f32.mrf.mxu0
        %v356 = vadd.f32 0.0, %v355
        %v357 = vpop.f32.mrf.mxu0
        %v358 = vadd.f32 0.0, %v357
        %359 = vdwg.mxu0
        %360 = vadd.xlane.f32.xlu0 %v351
        %v361 = vpop.xlane.xlu0 %360
        %362 = vadd.xlane.f32.xlu0 %v353
        %v363 = vpop.xlane.xlu0 %362
        %364 = vadd.xlane.f32.xlu0 %v356
        %v365 = vpop.xlane.xlu0 %364
        %366 = vadd.xlane.f32.xlu0 %v358
        %v367 = vpop.xlane.xlu0 %366
        %v368 = vadd.f32 %v304, %v361
        %v369 = vadd.f32 %v305, %v363
        %v370 = vadd.f32 %v306, %v365
        %v371 = vadd.f32 %v307, %v367
        %v372 = vmul.f32 %v351, %v351
        %v373 = vmul.f32 %v353, %v353
        %v374 = vmul.f32 %v356, %v356
        %v375 = vmul.f32 %v358, %v358
        %376 = vadd.xlane.f32.xlu0 %v372
        %v377 = vpop.xlane.xlu0 %376
        %378 = vadd.xlane.f32.xlu0 %v373
        %v379 = vpop.xlane.xlu0 %378
        %380 = vadd.xlane.f32.xlu0 %v374
        %v381 = vpop.xlane.xlu0 %380
        %382 = vadd.xlane.f32.xlu0 %v375
        %v383 = vpop.xlane.xlu0 %382
        %v384 = vadd.f32 %v320, %v377
        %v385 = vadd.f32 %v321, %v379
        %v386 = vadd.f32 %v322, %v381
        %v387 = vadd.f32 %v323, %v383
        %v388 = vpack.c.bf16 %v351, %v351
        %v389 = vpack.c.bf16 %v353, %v353
        %v390 = vpack.c.bf16 %v356, %v356
        %v391 = vpack.c.bf16 %v358, %v358
        %s392 = scalar_lea.vmem %s218, 16 [#allocation5]
        %393 = vst [vmem:[%s392] sm:$0xf] %v388
        %394 = vst [vmem:[%s392 + $0x4] sm:$0xf] %v389
        %395 = vst [vmem:[%s392 + $0x8] sm:$0xf] %v390
        %396 = vst [vmem:[%s392 + $0xc] sm:$0xf] %v391
        %s397 = scalar_lea.vmem %s195, 16 [#allocation2]
        %v398 = vld [vmem:[%s397] sm:$0xff]
        %v399 = vmul.f32 %v398, %v245
        %v400 = vadd.f32 %v399, %v251
        %v401 = vmax.f32 %v400, 0.0
        %v402 = vpack.c.bf16 %v401, %v401
        %v404 = vsel %vm273, %v402, 0
        %406 = vmatpush.bf16.msra.mxu0 0
        %407 = vmatpush.bf16.msra.mxu0 0
        %408 = vmatpush.bf16.msra.mxu0 0
        %409 = vmatpush.bf16.msra.mxu0 0
        %410 = vmatpush.bf16.msra.mxu0 0
        %411 = vmatpush.bf16.msra.mxu0 0
        %412 = vmatpush.bf16.msra.mxu0 0
        %413 = vmatpush.bf16.msra.mxu0 %v404
        %414 = vmatmul.bf16.gmra.mxu0 %v268
        %v415 = vpop.f32.mrf.mxu0
        %v416 = vadd.f32 0.0, %v415
        %v417 = vpop.f32.mrf.mxu0
        %v418 = vadd.f32 0.0, %v417
        %419 = vmatmul.bf16.gmra.mxu0 %v271
        %v420 = vpop.f32.mrf.mxu0
        %v421 = vadd.f32 0.0, %v420
        %v422 = vpop.f32.mrf.mxu0
        %v423 = vadd.f32 0.0, %v422
        %424 = vdwg.mxu0
        %425 = vadd.xlane.f32.xlu0 %v416
        %v426 = vpop.xlane.xlu0 %425
        %427 = vadd.xlane.f32.xlu0 %v418
        %v428 = vpop.xlane.xlu0 %427
        %429 = vadd.xlane.f32.xlu0 %v421
        %v430 = vpop.xlane.xlu0 %429
        %431 = vadd.xlane.f32.xlu0 %v423
        %v432 = vpop.xlane.xlu0 %431
        %v433 = vadd.f32 %v368, %v426
        %v434 = vadd.f32 %v369, %v428
        %v435 = vadd.f32 %v370, %v430
        %v436 = vadd.f32 %v371, %v432
        %v437 = vmul.f32 %v416, %v416
        %v438 = vmul.f32 %v418, %v418
        %v439 = vmul.f32 %v421, %v421
        %v440 = vmul.f32 %v423, %v423
        %441 = vadd.xlane.f32.xlu0 %v437
        %v442 = vpop.xlane.xlu0 %441
        %443 = vadd.xlane.f32.xlu0 %v438
        %v444 = vpop.xlane.xlu0 %443
        %445 = vadd.xlane.f32.xlu0 %v439
        %v446 = vpop.xlane.xlu0 %445
        %447 = vadd.xlane.f32.xlu0 %v440
        %v448 = vpop.xlane.xlu0 %447
        %v449 = vadd.f32 %v384, %v442
        %v450 = vadd.f32 %v385, %v444
        %v451 = vadd.f32 %v386, %v446
        %v452 = vadd.f32 %v387, %v448
        %v453 = vpack.c.bf16 %v416, %v416
        %v454 = vpack.c.bf16 %v418, %v418
        %v455 = vpack.c.bf16 %v421, %v421
        %v456 = vpack.c.bf16 %v423, %v423
        %s457 = scalar_lea.vmem %s218, 32 [#allocation5]
        %458 = vst [vmem:[%s457] sm:$0xf] %v453
        %459 = vst [vmem:[%s457 + $0x4] sm:$0xf] %v454
        %460 = vst [vmem:[%s457 + $0x8] sm:$0xf] %v455
        %461 = vst [vmem:[%s457 + $0xc] sm:$0xf] %v456
        %s462 = scalar_lea.vmem %s195, 24 [#allocation2]
        %v463 = vld [vmem:[%s462] sm:$0xff]
        %v464 = vmul.f32 %v463, %v245
        %v465 = vadd.f32 %v464, %v251
        %v466 = vmax.f32 %v465, 0.0
        %v467 = vpack.c.bf16 %v466, %v466
        %v469 = vsel %vm273, %v467, 0
        %471 = vmatpush.bf16.msra.mxu0 0
        %472 = vmatpush.bf16.msra.mxu0 0
        %473 = vmatpush.bf16.msra.mxu0 0
        %474 = vmatpush.bf16.msra.mxu0 0
        %475 = vmatpush.bf16.msra.mxu0 0
        %476 = vmatpush.bf16.msra.mxu0 0
        %477 = vmatpush.bf16.msra.mxu0 0
        %478 = vmatpush.bf16.msra.mxu0 %v469
        %479 = vmatmul.bf16.gmra.mxu0 %v268
        %v480 = vpop.f32.mrf.mxu0
        %v481 = vadd.f32 0.0, %v480
        %v482 = vpop.f32.mrf.mxu0
        %v483 = vadd.f32 0.0, %v482
        %484 = vmatmul.bf16.gmra.mxu0 %v271
        %v485 = vpop.f32.mrf.mxu0
        %v486 = vadd.f32 0.0, %v485
        %v487 = vpop.f32.mrf.mxu0
        %v488 = vadd.f32 0.0, %v487
        %489 = vdwg.mxu0
        %490 = vadd.xlane.f32.xlu0 %v481
        %v491 = vpop.xlane.xlu0 %490
        %492 = vadd.xlane.f32.xlu0 %v483
        %v493 = vpop.xlane.xlu0 %492
        %494 = vadd.xlane.f32.xlu0 %v486
        %v495 = vpop.xlane.xlu0 %494
        %496 = vadd.xlane.f32.xlu0 %v488
        %v497 = vpop.xlane.xlu0 %496
        %v498 = vadd.f32 %v433, %v491
        %v499 = vadd.f32 %v434, %v493
        %v500 = vadd.f32 %v435, %v495
        %v501 = vadd.f32 %v436, %v497
        %v502 = vmul.f32 %v481, %v481
        %v503 = vmul.f32 %v483, %v483
        %v504 = vmul.f32 %v486, %v486
        %v505 = vmul.f32 %v488, %v488
        %506 = vadd.xlane.f32.xlu0 %v502
        %v507 = vpop.xlane.xlu0 %506
        %508 = vadd.xlane.f32.xlu0 %v503
        %v509 = vpop.xlane.xlu0 %508
        %510 = vadd.xlane.f32.xlu0 %v504
        %v511 = vpop.xlane.xlu0 %510
        %512 = vadd.xlane.f32.xlu0 %v505
        %v513 = vpop.xlane.xlu0 %512
        %v514 = vadd.f32 %v449, %v507
        %v515 = vadd.f32 %v450, %v509
        %v516 = vadd.f32 %v451, %v511
        %v517 = vadd.f32 %v452, %v513
        %v518 = vpack.c.bf16 %v481, %v481
        %v519 = vpack.c.bf16 %v483, %v483
        %v520 = vpack.c.bf16 %v486, %v486
        %v521 = vpack.c.bf16 %v488, %v488
        %s522 = scalar_lea.vmem %s218, 48 [#allocation5]
        %523 = vst [vmem:[%s522] sm:$0xf] %v518
        %524 = vst [vmem:[%s522 + $0x4] sm:$0xf] %v519
        %525 = vst [vmem:[%s522 + $0x8] sm:$0xf] %v520
        %526 = vst [vmem:[%s522 + $0xc] sm:$0xf] %v521
        %vm527 = vcmask 7168
        %528 = vst.msk [vmem:[%s232] sm:$0xff] %vm527, %v498
        %529 = vst.msk [vmem:[%s232 + $0x8] sm:$0xff] %vm527, %v499
        %530 = vst.msk [vmem:[%s232 + $0x10] sm:$0xff] %vm527, %v500
        %531 = vst.msk [vmem:[%s232 + $0x18] sm:$0xff] %vm527, %v501
        %s532 = scalar_lea.vmem %s232, 32
        %533 = vst.msk [vmem:[%s532] sm:$0xff] %vm527, %v514
        %534 = vst.msk [vmem:[%s532 + $0x8] sm:$0xff] %vm527, %v515
        %535 = vst.msk [vmem:[%s532 + $0x10] sm:$0xff] %vm527, %v516
        %536 = vst.msk [vmem:[%s532 + $0x18] sm:$0xff] %vm527, %v517
        %s537 = sand.u32 %s98, 1
        %s538 = scalar_lea.sflag [#allocation4], %s537
        %s539 = sand.u32 %s98, 1
        %s540 = smul.addr %s539, 64
        %s541 = scalar_lea.vmem [#allocation5], %s540
        %p542 = scmp.lt.s32.totalorder %s22, 1
        %s543 = scalar_select %p542, %s22, 1
        %s544 = smul.addr %s543, 8
        %s545 = smul.addr %s544, 8
        %s546 = scalar_lea.vmem %s4, %s545
        // Predicated region
        $region37: #{tpu_custom_call.1} parent=31 // pred_check
          %p547 = pneg %p108
        $region38: #{tpu_custom_call.1} parent=31 // pred_check_branch
          %549 = sbr.rel (%p547) target = $region40
        $region39: #{tpu_custom_call.1} parent=31 // pred_region
          %s550 = smul.u32 4, %s22
          %552 = vsyncadd %s538, 0
          %s553 = smul.addr %s550, 4
          %s554 = smul.addr %s553, 4
          %s555 = scalar_lea.hbm %s3, %s554
          %s556 = sshll.u32 %s541, 4
          %s557 = int_to_ptr.vmem [resolvable:$true] %s556
          %s558 = sshll.u32 %s555, 4
          %s559 = int_to_ptr.hbm [resolvable:$true] %s558
          %564 = dma.vmem_to_hbm [thread:$0]  %s557, 1024, %s559, %s538, 64, 64, 4
        $region40: #{tpu_custom_call.1} parent=31 // pred_fallthru
          _
        // Predicated region
        $region41: #{tpu_custom_call.1} parent=31 // pred_check
          %p565 = pneg %p134
        $region42: #{tpu_custom_call.1} parent=31 // pred_check_branch
          %567 = sbr.rel (%p565) target = $region44
        $region43: #{tpu_custom_call.1} parent=31 // pred_region
          _
        $region44: #{tpu_custom_call.1} parent=31 // pred_fallthru
          _
      $region32: #{tpu_custom_call.1} parent=5 // pred_fallthru
        _
      %p568 = scmp.le.s32.totalorder 2, %s17
      // Predicated region
      $region45: #{tpu_custom_call.1} parent=5 // pred_check
        %p569 = pneg %p568
      $region46: #{tpu_custom_call.1} parent=5 // pred_check_branch
        %571 = sbr.rel (%p569) target = $region48
      $region47: #{tpu_custom_call.1} parent=5 // pred_region
        %s572 = ssub.s32 %s17, 2
        // Predicated region
        $region49: #{tpu_custom_call.1} parent=47 // pred_check
          %p573 = pneg %p114
        $region50: #{tpu_custom_call.1} parent=47 // pred_check_branch
          %575 = sbr.rel (%p573) target = $region52
        $region51: #{tpu_custom_call.1} parent=47 // pred_region
          %s576 = sand.u32 %s99, 1
          %s577 = scalar_lea.sflag [#allocation4], %s576
          %s578 = sand.u32 %s99, 1
          %s579 = smul.addr %s578, 64
          %s580 = scalar_lea.vmem [#allocation5], %s579
          %582 = dma.done %s577, 1024
        $region52: #{tpu_custom_call.1} parent=47 // pred_fallthru
          _
        // Predicated region
        $region53: #{tpu_custom_call.1} parent=47 // pred_check
          %p583 = pneg %p140
        $region54: #{tpu_custom_call.1} parent=47 // pred_check_branch
          %585 = sbr.rel (%p583) target = $region56
        $region55: #{tpu_custom_call.1} parent=47 // pred_region
          %p586 = scmp.lt.s32.totalorder %s23, 1
          %s587 = scalar_select %p586, %s23, 1
          %s588 = smul.addr %s587, 8
          %s589 = smul.addr %s588, 8
          %s590 = scalar_lea.vmem %s4, %s589
        $region56: #{tpu_custom_call.1} parent=47 // pred_fallthru
          _
      $region48: #{tpu_custom_call.1} parent=5 // pred_fallthru
        _
    $region6: #{tpu_custom_call.1} parent=1 // loop_footer
      %s21 = sadd.s32 1, %s17
    $region7: #{tpu_custom_call.1} parent=1 // loop_footer_branch
      %16 = sbr.rel target = $region3
    $region8: #{tpu_custom_call.1} parent=1 // loop_exit
      _
    %591 = vsyncpa [#allocation3], 1
    %s592 = scalar_lea.sflag [#allocation3], 1
    %593 = vsyncpa %s592, 1
    %594 = vsyncpa [#allocation4], 1
    %s595 = scalar_lea.sflag [#allocation4], 1
    %596 = vsyncpa %s595, 1

</llo_original>
